<compile_context>
chip_gen: v7x
topology: tpu7x:2x2x1
jax: 0.10.0
libtpu: 0.0.40
codegen_flags: <defaults>
</compile_context>

<pallas_src>
import jax
import jax.numpy as jnp
from jax.experimental import pallas as pl
from jax.experimental.pallas import tpu as pltpu

EMB_IN = 9                 # embedding_input_dim (sliced off, unused in forward)
IN_DIM = 12                # input_dim = embedding_output_dim(0) + 12
FEAT = EMB_IN + IN_DIM     # 21 = raw feature width of x
HID1 = 900                 # hidden_dim1 (true width)
HID1_PAD = 1024            # padded to a multiple of 128 lanes
OUT_DIM = 1                # output_dim
CHUNK = 256                # hidden columns per fused fc1+fc2 step (review: 256-512)
DEFAULT_TILE_B = 2048      # batch rows per grid step

assert HID1_PAD % CHUNK == 0


def _round_up(x, m):
    return (x + m - 1) // m * m


def _classifier_kernel(x_ref, w1_ref, b1_ref, w2_ref, b2_ref, o_ref):
    tile_b = x_ref.shape[0]

    # Cast activations to the matmul dtype once (bf16 by default -> MXU native).
    xb = x_ref[...].astype(w1_ref.dtype)                       # (tile_b, FEAT)

    # fc1 (MXU) + bias/ReLU (VPU, f32) + fc2 (VPU mul + XLU lane reduce), fused
    # per hidden chunk so the full (tile_b, HID1_PAD) hidden activation is
    # never materialized and never re-cast.
    acc = jnp.zeros((tile_b, OUT_DIM), jnp.float32)
    n_chunks = w1_ref.shape[1] // CHUNK
    for c in range(n_chunks):                                  # static, 4 iters
        cs = c * CHUNK
        ce = cs + CHUNK
        hc = jnp.dot(xb, w1_ref[:, cs:ce],
                     preferred_element_type=jnp.float32)       # (tile_b, CHUNK)
        hc = jnp.maximum(hc + b1_ref[:, cs:ce], 0.0)           # f32 epilogue
        p = hc * w2_ref[:, cs:ce]                              # fc2 on the VPU
        acc = acc + jnp.sum(p, axis=-1, keepdims=True)         # XLU reduce

    # sigmoid epilogue (all f32). exp(-|z|) never overflows; division via the
    # EUP approximate reciprocal. Rows of a partial last batch tile hold
    # unspecified data but are row-local and masked on output writeback.
    z = acc + b2_ref[...]                                      # (tile_b, 1)
    e = jnp.exp(-jnp.abs(z))
    num = jnp.where(z >= 0.0, 1.0, e)
    o_ref[...] = (num * pl.reciprocal(1.0 + e, approx=True)).astype(o_ref.dtype)


def binary_classifier_embedding(x, w1, b1, w2, b2, *,
                                tile_b=DEFAULT_TILE_B,
                                matmul_dtype=jnp.bfloat16):
    """Forward pass.

    x : (B, 21) float32
    w1: (HID1, IN_DIM), b1: (HID1,)   -- torch nn.Linear layout
    w2: (OUT_DIM, HID1), b2: (OUT_DIM,)
    Returns (B, 1) float32 = sigmoid(relu(x[:, 9:] @ w1.T + b1) @ w2.T + b2)
    """
    B, F = x.shape
    assert F == FEAT, f"expected {FEAT} input features, got {F}"

    # --- one-time weight layout ---
    # W1 -> (in, out): zero rows for the 9 unused embedding features, zero
    # columns for the 900->1024 hidden pad. bf16 for the MXU by default.
    w1p = jnp.zeros((FEAT, HID1_PAD), matmul_dtype)
    w1p = w1p.at[EMB_IN:, :HID1].set(w1.T.astype(matmul_dtype))
    b1p = jnp.zeros((1, HID1_PAD), jnp.float32).at[:, :HID1].set(
        b1.reshape(1, HID1).astype(jnp.float32))
    # W2 stays f32 and lane-dense (1, HID1_PAD): fc2 runs on the VPU/XLU.
    w2p = jnp.zeros((1, HID1_PAD), jnp.float32).at[:, :HID1].set(
        w2.reshape(1, HID1).astype(jnp.float32))
    b2p = b2.reshape(1, OUT_DIM).astype(jnp.float32)

    # --- batch tiling ---
    # Multiple of 8 sublanes; clamp for tiny batches; prefer >= 2 tiles when
    # the batch is big enough so the "parallel" axis splits across v7x's 2 TCs.
    tile_b = max(8, (int(tile_b) // 8) * 8)
    tile_b = min(tile_b, _round_up(B, 8))
    if B >= 256 and pl.cdiv(B, tile_b) < 2:
        tile_b = _round_up(pl.cdiv(B, 2), 8)
    grid = (pl.cdiv(B, tile_b),)

    cost = pl.CostEstimate(
        flops=2 * B * FEAT * HID1_PAD + 2 * B * HID1_PAD,
        transcendentals=2 * B,
        bytes_accessed=(B * (FEAT + OUT_DIM) * 4
                        + FEAT * HID1_PAD * jnp.dtype(matmul_dtype).itemsize
                        + 2 * HID1_PAD * 4),
    )

    return pl.pallas_call(
        _classifier_kernel,
        out_shape=jax.ShapeDtypeStruct((B, OUT_DIM), jnp.float32),
        grid_spec=pltpu.PrefetchScalarGridSpec(
            num_scalar_prefetch=0,
            grid=grid,
            in_specs=[
                # batch-tiled activations (auto double-buffered over the grid)
                pl.BlockSpec((tile_b, FEAT), lambda i: (i, 0)),
                # resident weights/biases (constant index_map)
                pl.BlockSpec((FEAT, HID1_PAD), lambda i: (0, 0)),
                pl.BlockSpec((1, HID1_PAD), lambda i: (0, 0)),
                pl.BlockSpec((1, HID1_PAD), lambda i: (0, 0)),
                pl.BlockSpec((1, OUT_DIM), lambda i: (0, 0)),
            ],
            out_specs=pl.BlockSpec((tile_b, OUT_DIM), lambda i: (i, 0)),
        ),
        compiler_params=pltpu.CompilerParams(
            dimension_semantics=("parallel",),   # v7x: shard batch over 2 TCs
            vmem_limit_bytes=32 << 20,           # portable across v5e/v6e/v7x
        ),
        cost_estimate=cost,
    )(x, w1p, b1p, w2p, b2p)


def init_params(key):
    """PyTorch nn.Linear-style init: U(-1/sqrt(fan_in), 1/sqrt(fan_in)),
    returned in torch layout (out_features, in_features)."""
    k1, k2, k3, k4 = jax.random.split(key, 4)
    bound1 = 1.0 / jnp.sqrt(IN_DIM)
    bound2 = 1.0 / jnp.sqrt(HID1)
    w1 = jax.random.uniform(k1, (HID1, IN_DIM), jnp.float32, -bound1, bound1)
    b1 = jax.random.uniform(k2, (HID1,), jnp.float32, -bound1, bound1)
    w2 = jax.random.uniform(k3, (OUT_DIM, HID1), jnp.float32, -bound2, bound2)
    b2 = jax.random.uniform(k4, (OUT_DIM,), jnp.float32, -bound2, bound2)
    return w1, b1, w2, b2


def _reference(x, w1, b1, w2, b2):
    h = jnp.maximum(x[:, EMB_IN:] @ w1.T + b1, 0.0)
    return jax.nn.sigmoid(h @ w2.T + b2[None, :])


if __name__ == "__main__":
    # NOTE: embedding_fc1 / embedding_fc2 are defined in the PyTorch module's
    # __init__ but never used in forward() (embedding_output_dim == 0), so they
    # are intentionally omitted.
    key = jax.random.PRNGKey(0)
    kx, kx2, kp = jax.random.split(key, 3)
    w1, b1, w2, b2 = init_params(kp)

    # Small single-tile case, default bf16 MXU path (loose tolerance vs f32 ref).
    B = 8
    x = jax.random.normal(kx, (B, FEAT), jnp.float32)            # (8, 21)
    out = jax.block_until_ready(binary_classifier_embedding(x, w1, b1, w2, b2))
    ref = _reference(x, w1, b1, w2, b2)
    assert out.shape == (B, OUT_DIM)
    assert jnp.all((out >= 0.0) & (out <= 1.0))
    assert jnp.allclose(out, ref, atol=2e-2, rtol=0.0)

    # Multi-tile case with a partial last block (exercises the grid path),
    # default tile selection (splits into >= 2 tiles for B >= 256).
    B2 = 300
    x2 = jax.random.normal(kx2, (B2, FEAT), jnp.float32)
    out2 = jax.block_until_ready(binary_classifier_embedding(x2, w1, b1, w2, b2))
    ref2 = _reference(x2, w1, b1, w2, b2)
    assert out2.shape == (B2, OUT_DIM)
    assert jnp.allclose(out2, ref2, atol=2e-2, rtol=0.0)

    # f32 MXU path at tighter tolerance (approx reciprocal is the only
    # remaining approximation), explicit small tile to exercise tiling.
    out3 = jax.block_until_ready(
        binary_classifier_embedding(x2, w1, b1, w2, b2,
                                    tile_b=128, matmul_dtype=jnp.float32))
    assert jnp.allclose(out3, ref2, atol=5e-3, rtol=0.0)

    print("KERNEL_OK")
</pallas_src>

<mosaic_0001>
module attributes {stable_mosaic.version = 11 : i64} {
  func.func @_classifier_kernel(%arg0: i32, %arg1: memref<8x21xf32, #tpu.memory_space<vmem>>, %arg2: memref<21x1024xbf16, #tpu.memory_space<vmem>>, %arg3: memref<1x1024xf32, #tpu.memory_space<vmem>>, %arg4: memref<1x1024xf32, #tpu.memory_space<vmem>>, %arg5: memref<1x1xf32, #tpu.memory_space<vmem>>, %arg6: memref<8x1xf32, #tpu.memory_space<vmem>>) attributes {dimension_semantics = [#tpu.dimension_semantics<parallel>], iteration_bounds = array<i64: 1>, scalar_prefetch = 0 : i64, scratch_operands = 0 : i64, tpu.core_type = #tpu.core_type<tc>, window_params = [{transform_indices = @transform_0, window_bounds = array<i64: 8, 21>}, {pipeline_mode = #tpu.pipeline_mode<synchronous>, transform_indices = @transform_1, window_bounds = array<i64: 21, 1024>}, {pipeline_mode = #tpu.pipeline_mode<synchronous>, transform_indices = @transform_2, window_bounds = array<i64: 1, 1024>}, {pipeline_mode = #tpu.pipeline_mode<synchronous>, transform_indices = @transform_3, window_bounds = array<i64: 1, 1024>}, {pipeline_mode = #tpu.pipeline_mode<synchronous>, transform_indices = @transform_4, window_bounds = array<i64: 1, 1>}, {transform_indices = @transform_5, window_bounds = array<i64: 8, 1>}]} {
    %c0 = arith.constant 0 : index
    %c0_0 = arith.constant 0 : index
    %0 = vector.load %arg1[%c0, %c0_0] : memref<8x21xf32, #tpu.memory_space<vmem>>, vector<8x21xf32>
    %1 = arith.truncf %0 : vector<8x21xf32> to vector<8x21xbf16>
    %cst = arith.constant 0.000000e+00 : f32
    %2 = vector.broadcast %cst : f32 to vector<8x1xf32>
    %c0_1 = arith.constant 0 : index
    %c0_2 = arith.constant 0 : index
    %3 = vector.load %arg2[%c0_1, %c0_2] : memref<21x1024xbf16, #tpu.memory_space<vmem>>, vector<21x256xbf16>
    %cst_3 = arith.constant dense<0.000000e+00> : vector<8x256xf32>
    %4 = tpu.matmul %1, %3, %cst_3 {dimension_numbers = #tpu.dot_dimension_numbers<[1], [0], [0], [1], [0, 0, 1, 1], [], []>} : vector<8x21xbf16>, vector<21x256xbf16>, vector<8x256xf32> -> vector<8x256xf32>
    %c0_4 = arith.constant 0 : index
    %c0_5 = arith.constant 0 : index
    %5 = vector.load %arg3[%c0_4, %c0_5] : memref<1x1024xf32, #tpu.memory_space<vmem>>, vector<1x256xf32>
    %6 = vector.broadcast %5 : vector<1x256xf32> to vector<8x256xf32>
    %7 = arith.addf %4, %6 : vector<8x256xf32>
    %cst_6 = arith.constant 0.000000e+00 : f32
    %8 = vector.broadcast %cst_6 : f32 to vector<8x256xf32>
    %9 = arith.maximumf %7, %8 : vector<8x256xf32>
    %c0_7 = arith.constant 0 : index
    %c0_8 = arith.constant 0 : index
    %10 = vector.load %arg4[%c0_7, %c0_8] : memref<1x1024xf32, #tpu.memory_space<vmem>>, vector<1x256xf32>
    %11 = vector.broadcast %10 : vector<1x256xf32> to vector<8x256xf32>
    %12 = arith.mulf %9, %11 : vector<8x256xf32>
    %cst_9 = arith.constant dense<0.000000e+00> : vector<8xf32>
    %13 = vector.multi_reduction <add>, %12, %cst_9 [1] : vector<8x256xf32> to vector<8xf32>
    %14 = vector.shape_cast %13 : vector<8xf32> to vector<8x1xf32>
    %15 = arith.addf %2, %14 : vector<8x1xf32>
    %c0_10 = arith.constant 0 : index
    %c256 = arith.constant 256 : index
    %16 = vector.load %arg2[%c0_10, %c256] : memref<21x1024xbf16, #tpu.memory_space<vmem>>, vector<21x256xbf16>
    %cst_11 = arith.constant dense<0.000000e+00> : vector<8x256xf32>
    %17 = tpu.matmul %1, %16, %cst_11 {dimension_numbers = #tpu.dot_dimension_numbers<[1], [0], [0], [1], [0, 0, 1, 1], [], []>} : vector<8x21xbf16>, vector<21x256xbf16>, vector<8x256xf32> -> vector<8x256xf32>
    %c0_12 = arith.constant 0 : index
    %c256_13 = arith.constant 256 : index
    %18 = vector.load %arg3[%c0_12, %c256_13] : memref<1x1024xf32, #tpu.memory_space<vmem>>, vector<1x256xf32>
    %19 = vector.broadcast %18 : vector<1x256xf32> to vector<8x256xf32>
    %20 = arith.addf %17, %19 : vector<8x256xf32>
    %cst_14 = arith.constant 0.000000e+00 : f32
    %21 = vector.broadcast %cst_14 : f32 to vector<8x256xf32>
    %22 = arith.maximumf %20, %21 : vector<8x256xf32>
    %c0_15 = arith.constant 0 : index
    %c256_16 = arith.constant 256 : index
    %23 = vector.load %arg4[%c0_15, %c256_16] : memref<1x1024xf32, #tpu.memory_space<vmem>>, vector<1x256xf32>
    %24 = vector.broadcast %23 : vector<1x256xf32> to vector<8x256xf32>
    %25 = arith.mulf %22, %24 : vector<8x256xf32>
    %cst_17 = arith.constant dense<0.000000e+00> : vector<8xf32>
    %26 = vector.multi_reduction <add>, %25, %cst_17 [1] : vector<8x256xf32> to vector<8xf32>
    %27 = vector.shape_cast %26 : vector<8xf32> to vector<8x1xf32>
    %28 = arith.addf %15, %27 : vector<8x1xf32>
    %c0_18 = arith.constant 0 : index
    %c512 = arith.constant 512 : index
    %29 = vector.load %arg2[%c0_18, %c512] : memref<21x1024xbf16, #tpu.memory_space<vmem>>, vector<21x256xbf16>
    %cst_19 = arith.constant dense<0.000000e+00> : vector<8x256xf32>
    %30 = tpu.matmul %1, %29, %cst_19 {dimension_numbers = #tpu.dot_dimension_numbers<[1], [0], [0], [1], [0, 0, 1, 1], [], []>} : vector<8x21xbf16>, vector<21x256xbf16>, vector<8x256xf32> -> vector<8x256xf32>
    %c0_20 = arith.constant 0 : index
    %c512_21 = arith.constant 512 : index
    %31 = vector.load %arg3[%c0_20, %c512_21] : memref<1x1024xf32, #tpu.memory_space<vmem>>, vector<1x256xf32>
    %32 = vector.broadcast %31 : vector<1x256xf32> to vector<8x256xf32>
    %33 = arith.addf %30, %32 : vector<8x256xf32>
    %cst_22 = arith.constant 0.000000e+00 : f32
    %34 = vector.broadcast %cst_22 : f32 to vector<8x256xf32>
    %35 = arith.maximumf %33, %34 : vector<8x256xf32>
    %c0_23 = arith.constant 0 : index
    %c512_24 = arith.constant 512 : index
    %36 = vector.load %arg4[%c0_23, %c512_24] : memref<1x1024xf32, #tpu.memory_space<vmem>>, vector<1x256xf32>
    %37 = vector.broadcast %36 : vector<1x256xf32> to vector<8x256xf32>
    %38 = arith.mulf %35, %37 : vector<8x256xf32>
    %cst_25 = arith.constant dense<0.000000e+00> : vector<8xf32>
    %39 = vector.multi_reduction <add>, %38, %cst_25 [1] : vector<8x256xf32> to vector<8xf32>
    %40 = vector.shape_cast %39 : vector<8xf32> to vector<8x1xf32>
    %41 = arith.addf %28, %40 : vector<8x1xf32>
    %c0_26 = arith.constant 0 : index
    %c768 = arith.constant 768 : index
    %42 = vector.load %arg2[%c0_26, %c768] : memref<21x1024xbf16, #tpu.memory_space<vmem>>, vector<21x256xbf16>
    %cst_27 = arith.constant dense<0.000000e+00> : vector<8x256xf32>
    %43 = tpu.matmul %1, %42, %cst_27 {dimension_numbers = #tpu.dot_dimension_numbers<[1], [0], [0], [1], [0, 0, 1, 1], [], []>} : vector<8x21xbf16>, vector<21x256xbf16>, vector<8x256xf32> -> vector<8x256xf32>
    %c0_28 = arith.constant 0 : index
    %c768_29 = arith.constant 768 : index
    %44 = vector.load %arg3[%c0_28, %c768_29] : memref<1x1024xf32, #tpu.memory_space<vmem>>, vector<1x256xf32>
    %45 = vector.broadcast %44 : vector<1x256xf32> to vector<8x256xf32>
    %46 = arith.addf %43, %45 : vector<8x256xf32>
    %cst_30 = arith.constant 0.000000e+00 : f32
    %47 = vector.broadcast %cst_30 : f32 to vector<8x256xf32>
    %48 = arith.maximumf %46, %47 : vector<8x256xf32>
    %c0_31 = arith.constant 0 : index
    %c768_32 = arith.constant 768 : index
    %49 = vector.load %arg4[%c0_31, %c768_32] : memref<1x1024xf32, #tpu.memory_space<vmem>>, vector<1x256xf32>
    %50 = vector.broadcast %49 : vector<1x256xf32> to vector<8x256xf32>
    %51 = arith.mulf %48, %50 : vector<8x256xf32>
    %cst_33 = arith.constant dense<0.000000e+00> : vector<8xf32>
    %52 = vector.multi_reduction <add>, %51, %cst_33 [1] : vector<8x256xf32> to vector<8xf32>
    %53 = vector.shape_cast %52 : vector<8xf32> to vector<8x1xf32>
    %54 = arith.addf %41, %53 : vector<8x1xf32>
    %c0_34 = arith.constant 0 : index
    %c0_35 = arith.constant 0 : index
    %55 = vector.load %arg5[%c0_34, %c0_35] : memref<1x1xf32, #tpu.memory_space<vmem>>, vector<1x1xf32>
    %56 = vector.broadcast %55 : vector<1x1xf32> to vector<8x1xf32>
    %57 = arith.addf %54, %56 : vector<8x1xf32>
    %58 = math.absf %57 : vector<8x1xf32>
    %cst_36 = arith.constant 0.000000e+00 : f32
    %59 = vector.broadcast %cst_36 : f32 to vector<8x1xf32>
    %60 = arith.subf %59, %58 : vector<8x1xf32>
    %61 = math.exp %60 : vector<8x1xf32>
    %cst_37 = arith.constant 0.000000e+00 : f32
    %62 = vector.broadcast %cst_37 : f32 to vector<8x1xf32>
    %63 = arith.cmpf oge, %57, %62 : vector<8x1xf32>
    %cst_38 = arith.constant 1.000000e+00 : f32
    %64 = vector.broadcast %cst_38 : f32 to vector<8x1xf32>
    %65 = arith.select %63, %64, %61 : vector<8x1xi1>, vector<8x1xf32>
    %cst_39 = arith.constant 1.000000e+00 : f32
    %66 = vector.broadcast %cst_39 : f32 to vector<8x1xf32>
    %67 = arith.addf %66, %61 : vector<8x1xf32>
    %68 = tpu.reciprocal %67 {approx = true} : vector<8x1xf32> -> vector<8x1xf32>
    %69 = arith.mulf %65, %68 : vector<8x1xf32>
    %c0_40 = arith.constant 0 : index
    %c0_41 = arith.constant 0 : index
    %70 = vector.load %arg6[%c0_40, %c0_41] : memref<8x1xf32, #tpu.memory_space<vmem>>, vector<8x1xf32>
    tpu.vector_store %arg6[%c0_40, %c0_41], %69 {strides = array<i32>} : memref<8x1xf32, #tpu.memory_space<vmem>>, vector<8x1xf32>,
    return
  }
  func.func @transform_0(%arg0: i32) -> (i32, i32) {
    %c0_i32 = arith.constant 0 : i32
    %c0_i32_0 = arith.constant 0 : i32
    return %arg0, %c0_i32 : i32, i32
  }
  func.func @transform_1(%arg0: i32) -> (i32, i32) {
    %c0_i32 = arith.constant 0 : i32
    %c0_i32_0 = arith.constant 0 : i32
    %c0_i32_1 = arith.constant 0 : i32
    return %c0_i32, %c0_i32_0 : i32, i32
  }
  func.func @transform_2(%arg0: i32) -> (i32, i32) {
    %c0_i32 = arith.constant 0 : i32
    %c0_i32_0 = arith.constant 0 : i32
    %c0_i32_1 = arith.constant 0 : i32
    return %c0_i32, %c0_i32_0 : i32, i32
  }
  func.func @transform_3(%arg0: i32) -> (i32, i32) {
    %c0_i32 = arith.constant 0 : i32
    %c0_i32_0 = arith.constant 0 : i32
    %c0_i32_1 = arith.constant 0 : i32
    return %c0_i32, %c0_i32_0 : i32, i32
  }
  func.func @transform_4(%arg0: i32) -> (i32, i32) {
    %c0_i32 = arith.constant 0 : i32
    %c0_i32_0 = arith.constant 0 : i32
    %c0_i32_1 = arith.constant 0 : i32
    return %c0_i32, %c0_i32_0 : i32, i32
  }
  func.func @transform_5(%arg0: i32) -> (i32, i32) {
    %c0_i32 = arith.constant 0 : i32
    %c0_i32_0 = arith.constant 0 : i32
    return %arg0, %c0_i32 : i32, i32
  }
}

</mosaic_0001>

<llo_original>
// kernel: tpu_custom_call.1
$region0: #{tpu_custom_call.1}
  #allocation0 [shape = 'u32[]', space=smem, size = 0x4, offset = 0x4, fixed_abs, tag = 'smem constant byte address 0x4 - core index']
  #allocation1 [shape = 'u32[144,128]{1,0:T(1,128)}', space=vmem, size = 0x12000, scoped, tag = 'internal scratch']
  #allocation2 [shape = 'f32[1,1]{1,0:T(1,128)S(1)}', space=vmem, size = 0x200, scoped, tag = 'scoped memory for tpu_custom_call.1']
  %s0 = inlined_call_operand.hbm [shape: f32[8,21], index: 0, kind: input, shape index: {}]
  %s1 = inlined_call_operand.hbm [shape: bf16[21,1024], index: 1, kind: input, shape index: {}]
  %s2 = inlined_call_operand.vmem [shape: f32[1,1024], index: 2, kind: input, shape index: {}]
  %s3 = inlined_call_operand.hbm [shape: f32[1,1024], index: 3, kind: input, shape index: {}]
  %s4 = inlined_call_operand.<no memory space> [shape: f32[1,1], index: 4, kind: input, shape index: {}]
  %s5 = inlined_call_operand.vmem [shape: f32[8,1], index: 5, kind: output, shape index: {}]
  %s6 = sld [smem:[#allocation0]]
  $region42: #{tpu_custom_call.1} parent=0
    _
  %s8 = ssub.s32 1, %s6
  %s9 = scalar_select 0, %s8, %s6
  %v10 = vstv %s4
  %11 = vst [vmem:[#allocation2] sm:$0x1] %v10
  $region1: #{tpu_custom_call.1} parent=0
    #allocation3 [shape = 'u8[4096]{0}', space=vmem, size = 0x1000, scoped, tag = 'input window, operand 0, single buffered']
    #allocation4 [shape = 's32[1]{0}', space=sflag, size = 0x4, scoped, tag = 'scoped memory for tpu_custom_call.1']
    #allocation5 [shape = 'u8[49152]{0}', space=vmem, size = 0xc000, scoped, tag = 'input window, operand 1, single buffered']
    #allocation6 [shape = 's32[1]{0}', space=sflag, size = 0x4, scoped, tag = 'scoped memory for tpu_custom_call.1']
    #allocation7 [shape = 'u8[4096]{0}', space=vmem, size = 0x1000, scoped, tag = 'input window, operand 3, single buffered']
    %12 = vsyncpa [#allocation4], 0
    %13 = vsyncpa [#allocation6], 0
    // Predicated region
    $region2: #{tpu_custom_call.1} parent=1 // pred_check
      _
    $region3: #{tpu_custom_call.1} parent=1 // pred_check_branch
      %15 = sbr.rel (0) target = $region5
    $region4: #{tpu_custom_call.1} parent=1 // pred_region
      %s17 = ssub.s32 128, 128
      %18 = vsyncadd [#allocation4], %s17
      %s20 = sshll.u32 [#allocation3], 4
      %s21 = int_to_ptr.vmem [resolvable:$true] %s20
      %23 = dma.hbm_to_vmem [thread:$0]  %s0, 128, %s21, [#allocation4]
    $region5: #{tpu_custom_call.1} parent=1 // pred_fallthru
      _
    // Predicated region
    $region6: #{tpu_custom_call.1} parent=1 // pred_check
      _
    $region7: #{tpu_custom_call.1} parent=1 // pred_check_branch
      %25 = sbr.rel (0) target = $region9
    $region8: #{tpu_custom_call.1} parent=1 // pred_region
      %s27 = ssub.s32 1536, 1536
      %28 = vsyncadd [#allocation6], %s27
      %s29 = sshll.u32 [#allocation5], 4
      %s30 = int_to_ptr.vmem [resolvable:$true] %s29
      %35 = dma.hbm_to_vmem [thread:$0]  %s1, 1536, %s30, [#allocation6], 512, 512, 32
    $region9: #{tpu_custom_call.1} parent=1 // pred_fallthru
      _
    // Predicated region
    $region10: #{tpu_custom_call.1} parent=1 // pred_check
      _
    $region11: #{tpu_custom_call.1} parent=1 // pred_check_branch
      %37 = sbr.rel (0) target = $region13
    $region12: #{tpu_custom_call.1} parent=1 // pred_region
      _
    $region13: #{tpu_custom_call.1} parent=1 // pred_fallthru
      _
    // Predicated region
    $region14: #{tpu_custom_call.1} parent=1 // pred_check
      _
    $region15: #{tpu_custom_call.1} parent=1 // pred_check_branch
      %39 = sbr.rel (0) target = $region17
    $region16: #{tpu_custom_call.1} parent=1 // pred_region
      %s41 = ssub.s32 128, 128
      %42 = vsyncadd [#allocation6], %s41
      %s44 = sshll.u32 [#allocation7], 4
      %s45 = int_to_ptr.vmem [resolvable:$true] %s44
      %47 = dma.hbm_to_vmem [thread:$0]  %s3, 128, %s45, [#allocation6]
    $region17: #{tpu_custom_call.1} parent=1 // pred_fallthru
      _
    // Predicated region
    $region18: #{tpu_custom_call.1} parent=1 // pred_check
      _
    $region19: #{tpu_custom_call.1} parent=1 // pred_check_branch
      %49 = sbr.rel (0) target = $region21
    $region20: #{tpu_custom_call.1} parent=1 // pred_region
      _
    $region21: #{tpu_custom_call.1} parent=1 // pred_fallthru
      _
    // Predicated region
    $region22: #{tpu_custom_call.1} parent=1 // pred_check
      _
    $region23: #{tpu_custom_call.1} parent=1 // pred_check_branch
      %51 = sbr.rel (0) target = $region25
    $region24: #{tpu_custom_call.1} parent=1 // pred_region
      %52 = dma.done [#allocation4], 128
    $region25: #{tpu_custom_call.1} parent=1 // pred_fallthru
      _
    // Predicated region
    $region26: #{tpu_custom_call.1} parent=1 // pred_check
      _
    $region27: #{tpu_custom_call.1} parent=1 // pred_check_branch
      %54 = sbr.rel (0) target = $region29
    $region28: #{tpu_custom_call.1} parent=1 // pred_region
      %55 = dma.done [#allocation6], 1536
    $region29: #{tpu_custom_call.1} parent=1 // pred_fallthru
      _
    // Predicated region
    $region30: #{tpu_custom_call.1} parent=1 // pred_check
      _
    $region31: #{tpu_custom_call.1} parent=1 // pred_check_branch
      %57 = sbr.rel (0) target = $region33
    $region32: #{tpu_custom_call.1} parent=1 // pred_region
      %58 = dma.done [#allocation6], 128
    $region33: #{tpu_custom_call.1} parent=1 // pred_fallthru
      _
    %v60 = vld [vmem:[#allocation3] sm:$0xff]
    %v61 = vpack.c.bf16 %v60, %v60
    %v62 = vld [vmem:[#allocation5] sm:$0xff]
    %v63 = vld [vmem:[#allocation5 + $0x20] sm:$0xff]
    %v64 = vld [vmem:[#allocation5 + $0x40] sm:$0x77]
    %v65 = vld [vmem:[%s2] sm:$0x3]
    %v67 = vlaneseq
    %v68 = vshrl.u32 %v67, 7
    %v69 = vsub.s32 0, %v68
    %v70 = vrot.slane %v65, %v69
    %v71 = vlaneseq
    %v72 = vshrl.u32 %v71, 7
    %v73 = vsub.s32 1, %v72
    %v74 = vrot.slane %v65, %v73
    %v80 = vunpack.c.l.b16 %v62
    %v81 = vunpack.c.h.b16 %v62
    %v82 = vunpack.c.l.b16 %v63
    %v83 = vunpack.c.h.b16 %v63
    %v84 = vunpack.c.l.b16 %v64
    %v85 = vunpack.c.h.b16 %v64
    %v86 = vpack.c.b16 %v82, %v80
    %v87 = vpack.c.b16 %v83, %v81
    %v88 = vpack.c.b16 %v84, %v84
    %v89 = vpack.c.b16 %v85, %v85
    %vm92 = vcmask 171008
    %v94 = vsel %vm92, %v61, 0
    %vm96 = vcmask 1041408
    %vm97 = vcmask 1042432
    %v98 = vsel %vm96, 4294967295, 65535
    %v99 = vsel %vm97, %v98, 0
    %v101 = vand.u32 %v88, %v99
    %v104 = vand.u32 %v89, %v99
    %106 = vmatprep.subr.bf16.mxu0 %v87
    %107 = vmatpush1.bf16.msra.mxu0 %v86
    %108 = vmatprep.subr.bf16.mxu0 %v104
    %109 = vmatpush1.bf16.msra.mxu0 %v101
    %110 = vmatprep.subr.bf16.mxu0 0
    %111 = vmatpush1.bf16.msra.mxu0 0
    %112 = vmatprep.subr.bf16.mxu0 0
    %113 = vmatpush1.bf16.msra.mxu0 0
    %114 = vmatprep.subr.bf16.mxu0 0
    %115 = vmatpush1.bf16.msra.mxu0 0
    %116 = vmatprep.subr.bf16.mxu0 0
    %117 = vmatpush1.bf16.msra.mxu0 0
    %118 = vmatprep.subr.bf16.mxu0 0
    %119 = vmatpush1.bf16.msra.mxu0 0
    %120 = vmatprep.subr.bf16.mxu0 0
    %121 = vmatpush1.bf16.msra.mxu0 0
    %122 = vmatprep.subr.bf16.mxu0 0
    %123 = vmatpush1.bf16.msra.mxu0 0
    %124 = vmatprep.subr.bf16.mxu0 0
    %125 = vmatpush1.bf16.msra.mxu0 0
    %126 = vmatprep.subr.bf16.mxu0 0
    %127 = vmatpush1.bf16.msra.mxu0 0
    %128 = vmatprep.subr.bf16.mxu0 0
    %129 = vmatpush1.bf16.msra.mxu0 0
    %130 = vmatprep.subr.bf16.mxu0 0
    %131 = vmatpush1.bf16.msra.mxu0 0
    %132 = vmatprep.subr.bf16.mxu0 0
    %133 = vmatpush1.bf16.msra.mxu0 0
    %134 = vmatprep.subr.bf16.mxu0 0
    %135 = vmatpush1.bf16.msra.mxu0 0
    %136 = vmatprep.subr.bf16.mxu0 0
    %137 = vmatpush1.bf16.msra.mxu0 0
    %138 = vmatprep.mubr.bf16.mxu0 0
    %139 = vmatmul.mubr.bf16.gmra.mrb[0].mxu0 %v94
    %v140 = vpop.f32.mrb[0].mxu0
    %v141 = vadd.f32 %v70, %v140
    %v142 = vpop.f32.mrb[0].mxu0
    %v143 = vadd.f32 %v74, %v142
    %v144 = vpop.f32.mrb[0].mxu0
    %v145 = vpop.f32.mrb[0].mxu0
    %146 = vdwg.mxu0
    %v147 = vmax.f32 %v141, 0.0
    %v148 = vmax.f32 %v143, 0.0
    %v149 = vld [vmem:[#allocation7] sm:$0x3]
    %v151 = vlaneseq
    %v152 = vshrl.u32 %v151, 7
    %v153 = vsub.s32 0, %v152
    %v154 = vrot.slane %v149, %v153
    %v155 = vlaneseq
    %v156 = vshrl.u32 %v155, 7
    %v157 = vsub.s32 1, %v156
    %v158 = vrot.slane %v149, %v157
    %v161 = vmul.f32 %v147, %v154
    %v162 = vmul.f32 %v148, %v158
    %v163 = vadd.f32 %v161, %v162
    %164 = vadd.xlane.f32.xlu0 %v163
    %v165 = vpop.xlane.xlu0 %164
    %v166 = vadd.f32 %v165, 0.0
    %v167 = vld [vmem:[#allocation5 + $0x8] sm:$0xff]
    %v168 = vld [vmem:[#allocation5 + $0x28] sm:$0xff]
    %v169 = vld [vmem:[#allocation5 + $0x48] sm:$0x77]
    %v170 = vld [vmem:[%s2 + $0x2] sm:$0x3]
    %v172 = vlaneseq
    %v173 = vshrl.u32 %v172, 7
    %v174 = vsub.s32 0, %v173
    %v175 = vrot.slane %v170, %v174
    %v176 = vlaneseq
    %v177 = vshrl.u32 %v176, 7
    %v178 = vsub.s32 1, %v177
    %v179 = vrot.slane %v170, %v178
    %v185 = vunpack.c.l.b16 %v167
    %v186 = vunpack.c.h.b16 %v167
    %v187 = vunpack.c.l.b16 %v168
    %v188 = vunpack.c.h.b16 %v168
    %v189 = vunpack.c.l.b16 %v169
    %v190 = vunpack.c.h.b16 %v169
    %v191 = vpack.c.b16 %v187, %v185
    %v192 = vpack.c.b16 %v188, %v186
    %v193 = vpack.c.b16 %v189, %v189
    %v194 = vpack.c.b16 %v190, %v190
    %v198 = vand.u32 %v193, %v99
    %v201 = vand.u32 %v194, %v99
    %203 = vmatprep.subr.bf16.mxu0 %v192
    %204 = vmatpush1.bf16.msra.mxu0 %v191
    %205 = vmatprep.subr.bf16.mxu0 %v201
    %206 = vmatpush1.bf16.msra.mxu0 %v198
    %207 = vmatprep.subr.bf16.mxu0 0
    %208 = vmatpush1.bf16.msra.mxu0 0
    %209 = vmatprep.subr.bf16.mxu0 0
    %210 = vmatpush1.bf16.msra.mxu0 0
    %211 = vmatprep.subr.bf16.mxu0 0
    %212 = vmatpush1.bf16.msra.mxu0 0
    %213 = vmatprep.subr.bf16.mxu0 0
    %214 = vmatpush1.bf16.msra.mxu0 0
    %215 = vmatprep.subr.bf16.mxu0 0
    %216 = vmatpush1.bf16.msra.mxu0 0
    %217 = vmatprep.subr.bf16.mxu0 0
    %218 = vmatpush1.bf16.msra.mxu0 0
    %219 = vmatprep.subr.bf16.mxu0 0
    %220 = vmatpush1.bf16.msra.mxu0 0
    %221 = vmatprep.subr.bf16.mxu0 0
    %222 = vmatpush1.bf16.msra.mxu0 0
    %223 = vmatprep.subr.bf16.mxu0 0
    %224 = vmatpush1.bf16.msra.mxu0 0
    %225 = vmatprep.subr.bf16.mxu0 0
    %226 = vmatpush1.bf16.msra.mxu0 0
    %227 = vmatprep.subr.bf16.mxu0 0
    %228 = vmatpush1.bf16.msra.mxu0 0
    %229 = vmatprep.subr.bf16.mxu0 0
    %230 = vmatpush1.bf16.msra.mxu0 0
    %231 = vmatprep.subr.bf16.mxu0 0
    %232 = vmatpush1.bf16.msra.mxu0 0
    %233 = vmatprep.subr.bf16.mxu0 0
    %234 = vmatpush1.bf16.msra.mxu0 0
    %235 = vmatprep.mubr.bf16.mxu0 0
    %236 = vmatmul.mubr.bf16.gmra.mrb[0].mxu0 %v94
    %v237 = vpop.f32.mrb[0].mxu0
    %v238 = vadd.f32 %v175, %v237
    %v239 = vpop.f32.mrb[0].mxu0
    %v240 = vadd.f32 %v179, %v239
    %v241 = vpop.f32.mrb[0].mxu0
    %v242 = vpop.f32.mrb[0].mxu0
    %243 = vdwg.mxu0
    %v244 = vmax.f32 %v238, 0.0
    %v245 = vmax.f32 %v240, 0.0
    %v246 = vld [vmem:[#allocation7 + $0x2] sm:$0x3]
    %v248 = vlaneseq
    %v249 = vshrl.u32 %v248, 7
    %v250 = vsub.s32 0, %v249
    %v251 = vrot.slane %v246, %v250
    %v252 = vlaneseq
    %v253 = vshrl.u32 %v252, 7
    %v254 = vsub.s32 1, %v253
    %v255 = vrot.slane %v246, %v254
    %v258 = vmul.f32 %v244, %v251
    %v259 = vmul.f32 %v245, %v255
    %v260 = vadd.f32 %v258, %v259
    %261 = vadd.xlane.f32.xlu0 %v260
    %v262 = vpop.xlane.xlu0 %261
    %v263 = vadd.f32 %v166, %v262
    %v264 = vld [vmem:[#allocation5 + $0x10] sm:$0xff]
    %v265 = vld [vmem:[#allocation5 + $0x30] sm:$0xff]
    %v266 = vld [vmem:[#allocation5 + $0x50] sm:$0x77]
    %v267 = vld [vmem:[%s2 + $0x4] sm:$0x3]
    %v269 = vlaneseq
    %v270 = vshrl.u32 %v269, 7
    %v271 = vsub.s32 0, %v270
    %v272 = vrot.slane %v267, %v271
    %v273 = vlaneseq
    %v274 = vshrl.u32 %v273, 7
    %v275 = vsub.s32 1, %v274
    %v276 = vrot.slane %v267, %v275
    %v282 = vunpack.c.l.b16 %v264
    %v283 = vunpack.c.h.b16 %v264
    %v284 = vunpack.c.l.b16 %v265
    %v285 = vunpack.c.h.b16 %v265
    %v286 = vunpack.c.l.b16 %v266
    %v287 = vunpack.c.h.b16 %v266
    %v288 = vpack.c.b16 %v284, %v282
    %v289 = vpack.c.b16 %v285, %v283
    %v290 = vpack.c.b16 %v286, %v286
    %v291 = vpack.c.b16 %v287, %v287
    %v295 = vand.u32 %v290, %v99
    %v298 = vand.u32 %v291, %v99
    %300 = vmatprep.subr.bf16.mxu0 %v289
    %301 = vmatpush1.bf16.msra.mxu0 %v288
    %302 = vmatprep.subr.bf16.mxu0 %v298
    %303 = vmatpush1.bf16.msra.mxu0 %v295
    %304 = vmatprep.subr.bf16.mxu0 0
    %305 = vmatpush1.bf16.msra.mxu0 0
    %306 = vmatprep.subr.bf16.mxu0 0
    %307 = vmatpush1.bf16.msra.mxu0 0
    %308 = vmatprep.subr.bf16.mxu0 0
    %309 = vmatpush1.bf16.msra.mxu0 0
    %310 = vmatprep.subr.bf16.mxu0 0
    %311 = vmatpush1.bf16.msra.mxu0 0
    %312 = vmatprep.subr.bf16.mxu0 0
    %313 = vmatpush1.bf16.msra.mxu0 0
    %314 = vmatprep.subr.bf16.mxu0 0
    %315 = vmatpush1.bf16.msra.mxu0 0
    %316 = vmatprep.subr.bf16.mxu0 0
    %317 = vmatpush1.bf16.msra.mxu0 0
    %318 = vmatprep.subr.bf16.mxu0 0
    %319 = vmatpush1.bf16.msra.mxu0 0
    %320 = vmatprep.subr.bf16.mxu0 0
    %321 = vmatpush1.bf16.msra.mxu0 0
    %322 = vmatprep.subr.bf16.mxu0 0
    %323 = vmatpush1.bf16.msra.mxu0 0
    %324 = vmatprep.subr.bf16.mxu0 0
    %325 = vmatpush1.bf16.msra.mxu0 0
    %326 = vmatprep.subr.bf16.mxu0 0
    %327 = vmatpush1.bf16.msra.mxu0 0
    %328 = vmatprep.subr.bf16.mxu0 0
    %329 = vmatpush1.bf16.msra.mxu0 0
    %330 = vmatprep.subr.bf16.mxu0 0
    %331 = vmatpush1.bf16.msra.mxu0 0
    %332 = vmatprep.mubr.bf16.mxu0 0
    %333 = vmatmul.mubr.bf16.gmra.mrb[0].mxu0 %v94
    %v334 = vpop.f32.mrb[0].mxu0
    %v335 = vadd.f32 %v272, %v334
    %v336 = vpop.f32.mrb[0].mxu0
    %v337 = vadd.f32 %v276, %v336
    %v338 = vpop.f32.mrb[0].mxu0
    %v339 = vpop.f32.mrb[0].mxu0
    %340 = vdwg.mxu0
    %v341 = vmax.f32 %v335, 0.0
    %v342 = vmax.f32 %v337, 0.0
    %v343 = vld [vmem:[#allocation7 + $0x4] sm:$0x3]
    %v345 = vlaneseq
    %v346 = vshrl.u32 %v345, 7
    %v347 = vsub.s32 0, %v346
    %v348 = vrot.slane %v343, %v347
    %v349 = vlaneseq
    %v350 = vshrl.u32 %v349, 7
    %v351 = vsub.s32 1, %v350
    %v352 = vrot.slane %v343, %v351
    %v355 = vmul.f32 %v341, %v348
    %v356 = vmul.f32 %v342, %v352
    %v357 = vadd.f32 %v355, %v356
    %358 = vadd.xlane.f32.xlu0 %v357
    %v359 = vpop.xlane.xlu0 %358
    %v360 = vadd.f32 %v263, %v359
    %v361 = vld [vmem:[#allocation5 + $0x18] sm:$0xff]
    %v362 = vld [vmem:[#allocation5 + $0x38] sm:$0xff]
    %v363 = vld [vmem:[#allocation5 + $0x58] sm:$0x77]
    %v364 = vld [vmem:[%s2 + $0x6] sm:$0x3]
    %v366 = vlaneseq
    %v367 = vshrl.u32 %v366, 7
    %v368 = vsub.s32 0, %v367
    %v369 = vrot.slane %v364, %v368
    %v370 = vlaneseq
    %v371 = vshrl.u32 %v370, 7
    %v372 = vsub.s32 1, %v371
    %v373 = vrot.slane %v364, %v372
    %v379 = vunpack.c.l.b16 %v361
    %v380 = vunpack.c.h.b16 %v361
    %v381 = vunpack.c.l.b16 %v362
    %v382 = vunpack.c.h.b16 %v362
    %v383 = vunpack.c.l.b16 %v363
    %v384 = vunpack.c.h.b16 %v363
    %v385 = vpack.c.b16 %v381, %v379
    %v386 = vpack.c.b16 %v382, %v380
    %v387 = vpack.c.b16 %v383, %v383
    %v388 = vpack.c.b16 %v384, %v384
    %v392 = vand.u32 %v387, %v99
    %v395 = vand.u32 %v388, %v99
    %397 = vmatprep.subr.bf16.mxu0 %v386
    %398 = vmatpush1.bf16.msra.mxu0 %v385
    %399 = vmatprep.subr.bf16.mxu0 %v395
    %400 = vmatpush1.bf16.msra.mxu0 %v392
    %401 = vmatprep.subr.bf16.mxu0 0
    %402 = vmatpush1.bf16.msra.mxu0 0
    %403 = vmatprep.subr.bf16.mxu0 0
    %404 = vmatpush1.bf16.msra.mxu0 0
    %405 = vmatprep.subr.bf16.mxu0 0
    %406 = vmatpush1.bf16.msra.mxu0 0
    %407 = vmatprep.subr.bf16.mxu0 0
    %408 = vmatpush1.bf16.msra.mxu0 0
    %409 = vmatprep.subr.bf16.mxu0 0
    %410 = vmatpush1.bf16.msra.mxu0 0
    %411 = vmatprep.subr.bf16.mxu0 0
    %412 = vmatpush1.bf16.msra.mxu0 0
    %413 = vmatprep.subr.bf16.mxu0 0
    %414 = vmatpush1.bf16.msra.mxu0 0
    %415 = vmatprep.subr.bf16.mxu0 0
    %416 = vmatpush1.bf16.msra.mxu0 0
    %417 = vmatprep.subr.bf16.mxu0 0
    %418 = vmatpush1.bf16.msra.mxu0 0
    %419 = vmatprep.subr.bf16.mxu0 0
    %420 = vmatpush1.bf16.msra.mxu0 0
    %421 = vmatprep.subr.bf16.mxu0 0
    %422 = vmatpush1.bf16.msra.mxu0 0
    %423 = vmatprep.subr.bf16.mxu0 0
    %424 = vmatpush1.bf16.msra.mxu0 0
    %425 = vmatprep.subr.bf16.mxu0 0
    %426 = vmatpush1.bf16.msra.mxu0 0
    %427 = vmatprep.subr.bf16.mxu0 0
    %428 = vmatpush1.bf16.msra.mxu0 0
    %429 = vmatprep.mubr.bf16.mxu0 0
    %430 = vmatmul.mubr.bf16.gmra.mrb[0].mxu0 %v94
    %v431 = vpop.f32.mrb[0].mxu0
    %v432 = vadd.f32 %v369, %v431
    %v433 = vpop.f32.mrb[0].mxu0
    %v434 = vadd.f32 %v373, %v433
    %v435 = vpop.f32.mrb[0].mxu0
    %v436 = vpop.f32.mrb[0].mxu0
    %437 = vdwg.mxu0
    %v438 = vmax.f32 %v432, 0.0
    %v439 = vmax.f32 %v434, 0.0
    %v440 = vld [vmem:[#allocation7 + $0x6] sm:$0x3]
    %v442 = vlaneseq
    %v443 = vshrl.u32 %v442, 7
    %v444 = vsub.s32 0, %v443
    %v445 = vrot.slane %v440, %v444
    %v446 = vlaneseq
    %v447 = vshrl.u32 %v446, 7
    %v448 = vsub.s32 1, %v447
    %v449 = vrot.slane %v440, %v448
    %v452 = vmul.f32 %v438, %v445
    %v453 = vmul.f32 %v439, %v449
    %v454 = vadd.f32 %v452, %v453
    %455 = vadd.xlane.f32.xlu0 %v454
    %v456 = vpop.xlane.xlu0 %455
    %v457 = vadd.f32 %v360, %v456
    %v458 = vld [vmem:[#allocation2] sm:$0x1]
    %v460 = vlaneseq
    %v461 = vshrl.u32 %v460, 7
    %v462 = vsub.s32 0, %v461
    %v463 = vrot.slane %v458, %v462
    %v465 = vadd.f32 %v457, %v463
    %v466 = vand.u32 2147483647, %v465
    %v467 = vsub.f32 0.0, %v466
    %v468 = vmul.f32 %v467, 1.442695
    %v469 = vpow.pop %v468
    %vm470 = vcmp.ge.f32.partialorder %v465, 0.0
    %v471 = vsel %vm470, 1.0, %v469
    %v472 = vadd.f32 %v469, 1.0
    %v473 = vrcp.pop %v472
    %v474 = vmul.f32 %v471, %v473
    %vm475 = vcmask 7168
    %476 = vst.msk [vmem:[%s5] sm:$0xff] %vm475, %v474
    // Predicated region
    $region34: #{tpu_custom_call.1} parent=1 // pred_check
      _
    $region35: #{tpu_custom_call.1} parent=1 // pred_check_branch
      %478 = sbr.rel (0) target = $region37
    $region36: #{tpu_custom_call.1} parent=1 // pred_region
      _
    $region37: #{tpu_custom_call.1} parent=1 // pred_fallthru
      _
    // Predicated region
    $region38: #{tpu_custom_call.1} parent=1 // pred_check
      _
    $region39: #{tpu_custom_call.1} parent=1 // pred_check_branch
      %480 = sbr.rel (0) target = $region41
    $region40: #{tpu_custom_call.1} parent=1 // pred_region
      _
    $region41: #{tpu_custom_call.1} parent=1 // pred_fallthru
      _
    %481 = vsyncpa [#allocation4], 1
    %482 = vsyncpa [#allocation6], 1

</llo_original>
